<compile_context>
chip_gen: v6e
topology: v6e:2x2x1
jax: 0.10.0
libtpu: 0.0.40
codegen_flags: <defaults>
</compile_context>

<pallas_src>
import jax
import jax.numpy as jnp
from jax import lax
from jax.experimental import pallas as pl
from jax.experimental.pallas import tpu as pltpu


FC1_UNITS = 200          # logical hidden sizes (as in the PyTorch module)
FC2_UNITS = 150
H1_PAD = 256             # fc1 padded to a lane multiple
H2_PAD = 256             # fc2 padded to a lane multiple
OUT_ROWS = 16            # packed output rows (actions live in rows [0, action_size))


def _round_up(x, m):
    return ((x + m - 1) // m) * m


def _cdiv(a, b):
    return (a + b - 1) // b


def actor_kernel(x_ref, w1_ref, b1_ref, w2_ref, b2_ref, w3_ref, b3_ref, o_ref):
    # Layer 1: Linear + ReLU (bf16 MXU matmul, f32 accumulation).
    x = x_ref[...].astype(jnp.bfloat16)
    h1 = jnp.dot(x, w1_ref[...], preferred_element_type=jnp.float32)
    h1 = jnp.maximum(h1 + b1_ref[...], 0.0)

    # Layer 2: Linear + ReLU.
    h2 = jnp.dot(h1.astype(jnp.bfloat16), w2_ref[...],
                 preferred_element_type=jnp.float32)
    h2 = jnp.maximum(h2 + b2_ref[...], 0.0)

    # Layer 3 (packed): w3 is stored (OUT_ROWS, H2_PAD) = (out, in); contract
    # both operands on their last dim -> (OUT_ROWS, tm).  The tanh then runs
    # over only OUT_ROWS sublanes instead of a 128-lane-wide slab, and the
    # output store stays lane-dense along the batch axis.
    h3_t = lax.dot_general(
        w3_ref[...], h2.astype(jnp.bfloat16),
        dimension_numbers=(((1,), (1,)), ((), ())),
        preferred_element_type=jnp.float32)
    o_ref[...] = jnp.tanh(h3_t + b3_ref[...]).astype(o_ref.dtype)


def _choose_tm(batch):
    """Batch tile: big enough to amortize step overhead, >=2 tiles for v7x."""
    b8 = _round_up(batch, 8)
    if b8 <= 256:
        return b8                      # single tile == full dim -> always legal
    # >= 2 tiles (so "parallel" can shard across v7x's 2 TCs), tile a multiple
    # of 128 (lane-dense packed output), capped at 1024 (v5e MXU / VMEM).
    n_tiles = max(2, _cdiv(b8, 1024))
    return min(1024, _round_up(_cdiv(b8, n_tiles), 128))


def actor_forward(state, params, action_size):
    """state: (batch, state_size) f32 -> actions: (batch, action_size) f32."""
    w1, b1, w2, b2, w3, b3 = params
    batch, state_size = state.shape

    tm = _choose_tm(batch)
    b_pad = _round_up(batch, tm)
    if b_pad != batch:
        state = jnp.pad(state, ((0, b_pad - batch), (0, 0)))
    grid = (b_pad // tm,)

    # Weights / biases: same block for every grid point -> stay VMEM-resident.
    resident = lambda a: pl.BlockSpec(a.shape, lambda i: (0, 0))

    out_packed = pl.pallas_call(
        actor_kernel,
        out_shape=jax.ShapeDtypeStruct((OUT_ROWS, b_pad), jnp.float32),
        grid=grid,
        in_specs=[
            pl.BlockSpec((tm, state_size), lambda i: (i, 0)),   # activations
            resident(w1), resident(b1),
            resident(w2), resident(b2),
            resident(w3), resident(b3),
        ],
        out_specs=pl.BlockSpec((OUT_ROWS, tm), lambda i: (0, i)),
        compiler_params=pltpu.CompilerParams(
            dimension_semantics=("parallel",)),
    )(state, w1, b1, w2, b2, w3, b3)

    # Free layout plumbing: strip the row padding, drop padded batch columns,
    # and transpose the tiny (action_size, batch) block back to (batch, act).
    return out_packed[:action_size, :batch].T


def init_actor_params(key, state_size, action_size,
                      fc1_units=FC1_UNITS, fc2_units=FC2_UNITS):
    """Deterministic init mirroring the PyTorch module's reset_parameters().

    Note: the original `hidden_init` uses weight.size()[0], which for
    nn.Linear is out_features; we reproduce that quirk
    (lim = 1/sqrt(out_features)).  Biases keep PyTorch's default Linear init:
    U(-1/sqrt(in_features), 1/sqrt(in_features)).

    Layout: w1/w2 are pre-transposed to (in, out); w3 is kept in the PyTorch
    (out, in) orientation and padded to (OUT_ROWS, H2_PAD) for the packed
    layer-3 contraction.  All weights are zero-padded to lane-friendly sizes
    and cast to bfloat16; biases stay f32 (b3 as a (OUT_ROWS, 1) column).
    Zero padding keeps the forward math identical to the unpadded module.
    """
    ks = jax.random.split(key, 6)

    def uni(k, shape, lim):
        return jax.random.uniform(k, shape, jnp.float32, -lim, lim)

    lim1 = 1.0 / jnp.sqrt(float(fc1_units))
    lim2 = 1.0 / jnp.sqrt(float(fc2_units))

    w1 = uni(ks[0], (state_size, fc1_units), lim1)                 # (in, out)
    b1 = uni(ks[1], (1, fc1_units), 1.0 / jnp.sqrt(float(state_size)))
    w2 = uni(ks[2], (fc1_units, fc2_units), lim2)                  # (in, out)
    b2 = uni(ks[3], (1, fc2_units), 1.0 / jnp.sqrt(float(fc1_units)))
    w3 = uni(ks[4], (action_size, fc2_units), 0.003)               # (out, in)
    b3 = uni(ks[5], (action_size, 1), 1.0 / jnp.sqrt(float(fc2_units)))

    def pad2(a, rows, cols):
        return jnp.pad(a, ((0, rows - a.shape[0]), (0, cols - a.shape[1])))

    w1p = pad2(w1, state_size, H1_PAD).astype(jnp.bfloat16)
    b1p = pad2(b1, 1, H1_PAD)
    w2p = pad2(w2, H1_PAD, H2_PAD).astype(jnp.bfloat16)
    b2p = pad2(b2, 1, H2_PAD)
    w3p = pad2(w3, OUT_ROWS, H2_PAD).astype(jnp.bfloat16)
    b3p = pad2(b3, OUT_ROWS, 1)
    return (w1p, b1p, w2p, b2p, w3p, b3p)


if __name__ == "__main__":
    key = jax.random.PRNGKey(0)
    k_params, k_state = jax.random.split(key)

    batch, state_size, action_size = 8, 24, 2
    params = init_actor_params(k_params, state_size, action_size)
    state = jax.random.normal(k_state, (batch, state_size), jnp.float32)

    out = actor_forward(state, params, action_size)
    out = jax.block_until_ready(out)

    # Pure-JAX reference using the same (bf16-quantized, zero-padded) weights.
    w1, b1, w2, b2, w3, b3 = params
    w1f, w2f, w3f = (w.astype(jnp.float32) for w in (w1, w2, w3))
    h = jnp.maximum(state @ w1f + b1, 0.0)
    h = jnp.maximum(h @ w2f + b2, 0.0)
    ref = jnp.tanh(h @ w3f.T + b3.T)[:, :action_size]

    assert out.shape == (batch, action_size)
    # bf16 activation casts inside the kernel -> allow ~1e-2 divergence.
    assert jnp.allclose(out, ref, atol=1e-2), "mismatch vs reference"

    print("KERNEL_OK")
</pallas_src>

<mosaic_0001>
module attributes {stable_mosaic.version = 11 : i64} {
  func.func @actor_kernel(%arg0: i32, %arg1: memref<8x24xf32, #tpu.memory_space<vmem>>, %arg2: memref<24x256xbf16, #tpu.memory_space<vmem>>, %arg3: memref<1x256xf32, #tpu.memory_space<vmem>>, %arg4: memref<256x256xbf16, #tpu.memory_space<vmem>>, %arg5: memref<1x256xf32, #tpu.memory_space<vmem>>, %arg6: memref<16x256xbf16, #tpu.memory_space<vmem>>, %arg7: memref<16x1xf32, #tpu.memory_space<vmem>>, %arg8: memref<16x8xf32, #tpu.memory_space<vmem>>) attributes {dimension_semantics = [#tpu.dimension_semantics<parallel>], iteration_bounds = array<i64: 1>, scalar_prefetch = 0 : i64, scratch_operands = 0 : i64, tpu.core_type = #tpu.core_type<tc>, window_params = [{transform_indices = @transform_0, window_bounds = array<i64: 8, 24>}, {pipeline_mode = #tpu.pipeline_mode<synchronous>, transform_indices = @transform_1, window_bounds = array<i64: 24, 256>}, {pipeline_mode = #tpu.pipeline_mode<synchronous>, transform_indices = @transform_2, window_bounds = array<i64: 1, 256>}, {pipeline_mode = #tpu.pipeline_mode<synchronous>, transform_indices = @transform_3, window_bounds = array<i64: 256, 256>}, {pipeline_mode = #tpu.pipeline_mode<synchronous>, transform_indices = @transform_4, window_bounds = array<i64: 1, 256>}, {pipeline_mode = #tpu.pipeline_mode<synchronous>, transform_indices = @transform_5, window_bounds = array<i64: 16, 256>}, {pipeline_mode = #tpu.pipeline_mode<synchronous>, transform_indices = @transform_6, window_bounds = array<i64: 16, 1>}, {transform_indices = @transform_7, window_bounds = array<i64: 16, 8>}]} {
    %c0 = arith.constant 0 : index
    %c0_0 = arith.constant 0 : index
    %0 = vector.load %arg1[%c0, %c0_0] : memref<8x24xf32, #tpu.memory_space<vmem>>, vector<8x24xf32>
    %1 = arith.truncf %0 : vector<8x24xf32> to vector<8x24xbf16>
    %c0_1 = arith.constant 0 : index
    %c0_2 = arith.constant 0 : index
    %2 = vector.load %arg2[%c0_1, %c0_2] : memref<24x256xbf16, #tpu.memory_space<vmem>>, vector<24x256xbf16>
    %cst = arith.constant dense<0.000000e+00> : vector<8x256xf32>
    %3 = tpu.matmul %1, %2, %cst {dimension_numbers = #tpu.dot_dimension_numbers<[1], [0], [0], [1], [0, 0, 1, 1], [], []>} : vector<8x24xbf16>, vector<24x256xbf16>, vector<8x256xf32> -> vector<8x256xf32>
    %c0_3 = arith.constant 0 : index
    %c0_4 = arith.constant 0 : index
    %4 = vector.load %arg3[%c0_3, %c0_4] : memref<1x256xf32, #tpu.memory_space<vmem>>, vector<1x256xf32>
    %5 = vector.broadcast %4 : vector<1x256xf32> to vector<8x256xf32>
    %6 = arith.addf %3, %5 : vector<8x256xf32>
    %cst_5 = arith.constant 0.000000e+00 : f32
    %7 = vector.broadcast %cst_5 : f32 to vector<8x256xf32>
    %8 = arith.maximumf %6, %7 : vector<8x256xf32>
    %9 = arith.truncf %8 : vector<8x256xf32> to vector<8x256xbf16>
    %c0_6 = arith.constant 0 : index
    %c0_7 = arith.constant 0 : index
    %10 = vector.load %arg4[%c0_6, %c0_7] : memref<256x256xbf16, #tpu.memory_space<vmem>>, vector<256x256xbf16>
    %cst_8 = arith.constant dense<0.000000e+00> : vector<8x256xf32>
    %11 = tpu.matmul %9, %10, %cst_8 {dimension_numbers = #tpu.dot_dimension_numbers<[1], [0], [0], [1], [0, 0, 1, 1], [], []>} : vector<8x256xbf16>, vector<256x256xbf16>, vector<8x256xf32> -> vector<8x256xf32>
    %c0_9 = arith.constant 0 : index
    %c0_10 = arith.constant 0 : index
    %12 = vector.load %arg5[%c0_9, %c0_10] : memref<1x256xf32, #tpu.memory_space<vmem>>, vector<1x256xf32>
    %13 = vector.broadcast %12 : vector<1x256xf32> to vector<8x256xf32>
    %14 = arith.addf %11, %13 : vector<8x256xf32>
    %cst_11 = arith.constant 0.000000e+00 : f32
    %15 = vector.broadcast %cst_11 : f32 to vector<8x256xf32>
    %16 = arith.maximumf %14, %15 : vector<8x256xf32>
    %c0_12 = arith.constant 0 : index
    %c0_13 = arith.constant 0 : index
    %17 = vector.load %arg6[%c0_12, %c0_13] : memref<16x256xbf16, #tpu.memory_space<vmem>>, vector<16x256xbf16>
    %18 = arith.truncf %16 : vector<8x256xf32> to vector<8x256xbf16>
    %cst_14 = arith.constant dense<0.000000e+00> : vector<16x8xf32>
    %19 = tpu.matmul %17, %18, %cst_14 {dimension_numbers = #tpu.dot_dimension_numbers<[1], [1], [0], [0], [0, 0, 1, 0], [], []>} : vector<16x256xbf16>, vector<8x256xbf16>, vector<16x8xf32> -> vector<16x8xf32>
    %c0_15 = arith.constant 0 : index
    %c0_16 = arith.constant 0 : index
    %20 = vector.load %arg7[%c0_15, %c0_16] : memref<16x1xf32, #tpu.memory_space<vmem>>, vector<16x1xf32>
    %21 = vector.broadcast %20 : vector<16x1xf32> to vector<16x8xf32>
    %22 = arith.addf %19, %21 : vector<16x8xf32>
    %23 = math.tanh %22 : vector<16x8xf32>
    %c0_17 = arith.constant 0 : index
    %c0_18 = arith.constant 0 : index
    %24 = vector.load %arg8[%c0_17, %c0_18] : memref<16x8xf32, #tpu.memory_space<vmem>>, vector<16x8xf32>
    tpu.vector_store %arg8[%c0_17, %c0_18], %23 {strides = array<i32>} : memref<16x8xf32, #tpu.memory_space<vmem>>, vector<16x8xf32>,
    return
  }
  func.func @transform_0(%arg0: i32) -> (i32, i32) {
    %c0_i32 = arith.constant 0 : i32
    %c0_i32_0 = arith.constant 0 : i32
    return %arg0, %c0_i32 : i32, i32
  }
  func.func @transform_1(%arg0: i32) -> (i32, i32) {
    %c0_i32 = arith.constant 0 : i32
    %c0_i32_0 = arith.constant 0 : i32
    %c0_i32_1 = arith.constant 0 : i32
    return %c0_i32, %c0_i32_0 : i32, i32
  }
  func.func @transform_2(%arg0: i32) -> (i32, i32) {
    %c0_i32 = arith.constant 0 : i32
    %c0_i32_0 = arith.constant 0 : i32
    %c0_i32_1 = arith.constant 0 : i32
    return %c0_i32, %c0_i32_0 : i32, i32
  }
  func.func @transform_3(%arg0: i32) -> (i32, i32) {
    %c0_i32 = arith.constant 0 : i32
    %c0_i32_0 = arith.constant 0 : i32
    %c0_i32_1 = arith.constant 0 : i32
    return %c0_i32, %c0_i32_0 : i32, i32
  }
  func.func @transform_4(%arg0: i32) -> (i32, i32) {
    %c0_i32 = arith.constant 0 : i32
    %c0_i32_0 = arith.constant 0 : i32
    %c0_i32_1 = arith.constant 0 : i32
    return %c0_i32, %c0_i32_0 : i32, i32
  }
  func.func @transform_5(%arg0: i32) -> (i32, i32) {
    %c0_i32 = arith.constant 0 : i32
    %c0_i32_0 = arith.constant 0 : i32
    %c0_i32_1 = arith.constant 0 : i32
    return %c0_i32, %c0_i32_0 : i32, i32
  }
  func.func @transform_6(%arg0: i32) -> (i32, i32) {
    %c0_i32 = arith.constant 0 : i32
    %c0_i32_0 = arith.constant 0 : i32
    %c0_i32_1 = arith.constant 0 : i32
    return %c0_i32, %c0_i32_0 : i32, i32
  }
  func.func @transform_7(%arg0: i32) -> (i32, i32) {
    %c0_i32 = arith.constant 0 : i32
    %c0_i32_0 = arith.constant 0 : i32
    return %c0_i32, %arg0 : i32, i32
  }
}

</mosaic_0001>

<llo_original>
// kernel: tpu_custom_call.1
$region0: #{tpu_custom_call.1}
  #allocation0 [shape = 'u32[]', space=smem, size = 0x4, offset = 0x4, fixed_abs, tag = 'smem constant byte address 0x4 - core index']
  #allocation1 [shape = 'u32[144,128]{1,0:T(1,128)}', space=vmem, size = 0x12000, scoped, tag = 'internal scratch']
  %s0 = inlined_call_operand.vmem [shape: f32[8,24], index: 0, kind: input, shape index: {}]
  %s1 = inlined_call_operand.hbm [shape: bf16[24,256], index: 1, kind: input, shape index: {}]
  %s2 = inlined_call_operand.vmem [shape: f32[1,256], index: 2, kind: input, shape index: {}]
  %s3 = inlined_call_operand.hbm [shape: bf16[256,256], index: 3, kind: input, shape index: {}]
  %s4 = inlined_call_operand.hbm [shape: f32[1,256], index: 4, kind: input, shape index: {}]
  %s5 = inlined_call_operand.vmem [shape: bf16[16,256], index: 5, kind: input, shape index: {}]
  %s6 = inlined_call_operand.vmem [shape: f32[16,1], index: 6, kind: input, shape index: {}]
  %s7 = inlined_call_operand.vmem [shape: f32[16,8], index: 7, kind: output, shape index: {}]
  %s8 = sld [smem:[#allocation0]]
  $region50: #{tpu_custom_call.1} parent=0
    _
  %s10 = ssub.s32 1, %s8
  %s11 = scalar_select 0, %s10, %s8
  $region1: #{tpu_custom_call.1} parent=0
    #allocation2 [shape = 'u8[12288]{0}', space=vmem, size = 0x3000, scoped, tag = 'input window, operand 1, single buffered']
    #allocation3 [shape = 's32[1]{0}', space=sflag, size = 0x4, scoped, tag = 'scoped memory for tpu_custom_call.1']
    #allocation4 [shape = 'u8[131072]{0}', space=vmem, size = 0x20000, scoped, tag = 'input window, operand 3, single buffered']
    #allocation5 [shape = 's32[1]{0}', space=sflag, size = 0x4, scoped, tag = 'scoped memory for tpu_custom_call.1']
    #allocation6 [shape = 'u8[1024]{0}', space=vmem, size = 0x400, scoped, tag = 'input window, operand 4, single buffered']
    %12 = vsyncpa [#allocation3], 0
    %13 = vsyncpa [#allocation5], 0
    // Predicated region
    $region2: #{tpu_custom_call.1} parent=1 // pred_check
      _
    $region3: #{tpu_custom_call.1} parent=1 // pred_check_branch
      %15 = sbr.rel (0) target = $region5
    $region4: #{tpu_custom_call.1} parent=1 // pred_region
      _
    $region5: #{tpu_custom_call.1} parent=1 // pred_fallthru
      _
    // Predicated region
    $region6: #{tpu_custom_call.1} parent=1 // pred_check
      _
    $region7: #{tpu_custom_call.1} parent=1 // pred_check_branch
      %17 = sbr.rel (0) target = $region9
    $region8: #{tpu_custom_call.1} parent=1 // pred_region
      %s19 = ssub.s32 384, 384
      %20 = vsyncadd [#allocation3], %s19
      %s21 = sshll.u32 [#allocation2], 4
      %s22 = int_to_ptr.vmem [resolvable:$true] %s21
      %27 = dma.hbm_to_vmem [thread:$0]  %s1, 384, %s22, [#allocation3], 128, 128, 8
    $region9: #{tpu_custom_call.1} parent=1 // pred_fallthru
      _
    // Predicated region
    $region10: #{tpu_custom_call.1} parent=1 // pred_check
      _
    $region11: #{tpu_custom_call.1} parent=1 // pred_check_branch
      %29 = sbr.rel (0) target = $region13
    $region12: #{tpu_custom_call.1} parent=1 // pred_region
      _
    $region13: #{tpu_custom_call.1} parent=1 // pred_fallthru
      _
    // Predicated region
    $region14: #{tpu_custom_call.1} parent=1 // pred_check
      _
    $region15: #{tpu_custom_call.1} parent=1 // pred_check_branch
      %31 = sbr.rel (0) target = $region17
    $region16: #{tpu_custom_call.1} parent=1 // pred_region
      %s33 = ssub.s32 4096, 4096
      %34 = vsyncadd [#allocation5], %s33
      %s35 = sshll.u32 [#allocation4], 4
      %s36 = int_to_ptr.vmem [resolvable:$true] %s35
      %41 = dma.hbm_to_vmem [thread:$0]  %s3, 4096, %s36, [#allocation5], 128, 128, 8
    $region17: #{tpu_custom_call.1} parent=1 // pred_fallthru
      _
    // Predicated region
    $region18: #{tpu_custom_call.1} parent=1 // pred_check
      _
    $region19: #{tpu_custom_call.1} parent=1 // pred_check_branch
      %43 = sbr.rel (0) target = $region21
    $region20: #{tpu_custom_call.1} parent=1 // pred_region
      %s45 = ssub.s32 32, 32
      %46 = vsyncadd [#allocation5], %s45
      %s48 = sshll.u32 [#allocation6], 4
      %s49 = int_to_ptr.vmem [resolvable:$true] %s48
      %51 = dma.hbm_to_vmem [thread:$0]  %s4, 32, %s49, [#allocation5]
    $region21: #{tpu_custom_call.1} parent=1 // pred_fallthru
      _
    // Predicated region
    $region22: #{tpu_custom_call.1} parent=1 // pred_check
      _
    $region23: #{tpu_custom_call.1} parent=1 // pred_check_branch
      %53 = sbr.rel (0) target = $region25
    $region24: #{tpu_custom_call.1} parent=1 // pred_region
      _
    $region25: #{tpu_custom_call.1} parent=1 // pred_fallthru
      _
    // Predicated region
    $region26: #{tpu_custom_call.1} parent=1 // pred_check
      _
    $region27: #{tpu_custom_call.1} parent=1 // pred_check_branch
      %55 = sbr.rel (0) target = $region29
    $region28: #{tpu_custom_call.1} parent=1 // pred_region
      _
    $region29: #{tpu_custom_call.1} parent=1 // pred_fallthru
      _
    // Predicated region
    $region30: #{tpu_custom_call.1} parent=1 // pred_check
      _
    $region31: #{tpu_custom_call.1} parent=1 // pred_check_branch
      %57 = sbr.rel (0) target = $region33
    $region32: #{tpu_custom_call.1} parent=1 // pred_region
      %58 = dma.done [#allocation3], 384
    $region33: #{tpu_custom_call.1} parent=1 // pred_fallthru
      _
    // Predicated region
    $region34: #{tpu_custom_call.1} parent=1 // pred_check
      _
    $region35: #{tpu_custom_call.1} parent=1 // pred_check_branch
      %60 = sbr.rel (0) target = $region37
    $region36: #{tpu_custom_call.1} parent=1 // pred_region
      %61 = dma.done [#allocation5], 4096
    $region37: #{tpu_custom_call.1} parent=1 // pred_fallthru
      _
    // Predicated region
    $region38: #{tpu_custom_call.1} parent=1 // pred_check
      _
    $region39: #{tpu_custom_call.1} parent=1 // pred_check_branch
      %63 = sbr.rel (0) target = $region41
    $region40: #{tpu_custom_call.1} parent=1 // pred_region
      %64 = dma.done [#allocation5], 32
    $region41: #{tpu_custom_call.1} parent=1 // pred_fallthru
      _
    %v66 = vld [vmem:[%s0] sm:$0xff]
    %v67 = vpack.c.bf16 %v66, %v66
    %v68 = vld [vmem:[#allocation2] sm:$0xff]
    %v69 = vld [vmem:[#allocation2 + $0x8] sm:$0xff]
    %v70 = vld [vmem:[#allocation2 + $0x10] sm:$0xff]
    %v71 = vld [vmem:[%s2] sm:$0x3]
    %v73 = vlaneseq
    %v74 = vshrl.u32 %v73, 7
    %v75 = vsub.s32 0, %v74
    %v76 = vrot.slane %v71, %v75
    %v77 = vlaneseq
    %v78 = vshrl.u32 %v77, 7
    %v79 = vsub.s32 1, %v78
    %v80 = vrot.slane %v71, %v79
    %v86 = vunpack.c.l.b16 %v68
    %v87 = vunpack.c.h.b16 %v68
    %v88 = vunpack.c.l.b16 %v69
    %v89 = vunpack.c.h.b16 %v69
    %v90 = vunpack.c.l.b16 %v70
    %v91 = vunpack.c.h.b16 %v70
    %v92 = vpack.c.b16 %v88, %v86
    %v93 = vpack.c.b16 %v89, %v87
    %v94 = vpack.c.b16 %v90, %v90
    %v95 = vpack.c.b16 %v91, %v91
    %vm98 = vcmask 195584
    %v100 = vsel %vm98, %v67, 0
    %vm102 = vcmask 1043456
    %v104 = vsel %vm102, %v94, 0
    %v107 = vsel %vm102, %v95, 0
    %109 = vmatprep.subr.bf16.mxu0 0
    %110 = vmatpush1.bf16.msra.mxu0 0
    %111 = vmatprep.subr.bf16.mxu0 0
    %112 = vmatpush1.bf16.msra.mxu0 0
    %113 = vmatprep.subr.bf16.mxu0 0
    %114 = vmatpush1.bf16.msra.mxu0 0
    %115 = vmatprep.subr.bf16.mxu0 0
    %116 = vmatpush1.bf16.msra.mxu0 0
    %117 = vmatprep.subr.bf16.mxu0 0
    %118 = vmatpush1.bf16.msra.mxu0 0
    %119 = vmatprep.subr.bf16.mxu0 0
    %120 = vmatpush1.bf16.msra.mxu0 0
    %121 = vmatprep.subr.bf16.mxu0 %v107
    %122 = vmatpush1.bf16.msra.mxu0 %v104
    %123 = vmatprep.subr.bf16.mxu0 %v93
    %124 = vmatpush1.bf16.msra.mxu0 %v92
    %125 = vmatprep.subr.bf16.mxu0 0
    %126 = vmatpush2.bf16.msra.mxu0 0
    %127 = vmatprep.subr.bf16.mxu0 0
    %128 = vmatpush2.bf16.msra.mxu0 0
    %129 = vmatprep.subr.bf16.mxu0 0
    %130 = vmatpush2.bf16.msra.mxu0 0
    %131 = vmatprep.subr.bf16.mxu0 0
    %132 = vmatpush2.bf16.msra.mxu0 0
    %133 = vmatprep.subr.bf16.mxu0 0
    %134 = vmatpush2.bf16.msra.mxu0 0
    %135 = vmatprep.subr.bf16.mxu0 0
    %136 = vmatpush2.bf16.msra.mxu0 0
    %137 = vmatprep.subr.bf16.mxu0 0
    %138 = vmatpush2.bf16.msra.mxu0 0
    %139 = vmatprep.subr.bf16.mxu0 0
    %140 = vmatpush2.bf16.msra.mxu0 0
    %141 = vmatprep.mubr.bf16.mxu0 0
    %142 = vmatmul.mubr.bf16.gmra.mxu0 %v100
    %v143 = vpop.f32.mrf.mxu0
    %v144 = vadd.f32 %v76, %v143
    %v145 = vpop.f32.mrf.mxu0
    %v146 = vadd.f32 %v80, %v145
    %v147 = vpop.f32.mrf.mxu0
    %v148 = vpop.f32.mrf.mxu0
    %149 = vdwg.mxu0
    %v150 = vmax.f32 %v144, 0.0
    %v151 = vmax.f32 %v146, 0.0
    %v152 = vpack.c.bf16 %v150, %v150
    %v153 = vpack.c.bf16 %v151, %v151
    %v154 = vld [vmem:[#allocation4] sm:$0xff]
    %v155 = vld [vmem:[#allocation4 + $0x8] sm:$0xff]
    %v156 = vld [vmem:[#allocation4 + $0x10] sm:$0xff]
    %v157 = vld [vmem:[#allocation4 + $0x18] sm:$0xff]
    %v158 = vld [vmem:[#allocation4 + $0x20] sm:$0xff]
    %v159 = vld [vmem:[#allocation4 + $0x28] sm:$0xff]
    %v160 = vld [vmem:[#allocation4 + $0x30] sm:$0xff]
    %v161 = vld [vmem:[#allocation4 + $0x38] sm:$0xff]
    %v162 = vld [vmem:[#allocation4 + $0x40] sm:$0xff]
    %v163 = vld [vmem:[#allocation4 + $0x48] sm:$0xff]
    %v164 = vld [vmem:[#allocation4 + $0x50] sm:$0xff]
    %v165 = vld [vmem:[#allocation4 + $0x58] sm:$0xff]
    %v166 = vld [vmem:[#allocation4 + $0x60] sm:$0xff]
    %v167 = vld [vmem:[#allocation4 + $0x68] sm:$0xff]
    %v168 = vld [vmem:[#allocation4 + $0x70] sm:$0xff]
    %v169 = vld [vmem:[#allocation4 + $0x78] sm:$0xff]
    %v170 = vld [vmem:[#allocation4 + $0x80] sm:$0xff]
    %v171 = vld [vmem:[#allocation4 + $0x88] sm:$0xff]
    %v172 = vld [vmem:[#allocation4 + $0x90] sm:$0xff]
    %v173 = vld [vmem:[#allocation4 + $0x98] sm:$0xff]
    %v174 = vld [vmem:[#allocation4 + $0xa0] sm:$0xff]
    %v175 = vld [vmem:[#allocation4 + $0xa8] sm:$0xff]
    %v176 = vld [vmem:[#allocation4 + $0xb0] sm:$0xff]
    %v177 = vld [vmem:[#allocation4 + $0xb8] sm:$0xff]
    %v178 = vld [vmem:[#allocation4 + $0xc0] sm:$0xff]
    %v179 = vld [vmem:[#allocation4 + $0xc8] sm:$0xff]
    %v180 = vld [vmem:[#allocation4 + $0xd0] sm:$0xff]
    %v181 = vld [vmem:[#allocation4 + $0xd8] sm:$0xff]
    %v182 = vld [vmem:[#allocation4 + $0xe0] sm:$0xff]
    %v183 = vld [vmem:[#allocation4 + $0xe8] sm:$0xff]
    %v184 = vld [vmem:[#allocation4 + $0xf0] sm:$0xff]
    %v185 = vld [vmem:[#allocation4 + $0xf8] sm:$0xff]
    %v186 = vld [vmem:[#allocation6] sm:$0x3]
    %v188 = vlaneseq
    %v189 = vshrl.u32 %v188, 7
    %v190 = vsub.s32 0, %v189
    %v191 = vrot.slane %v186, %v190
    %v192 = vlaneseq
    %v193 = vshrl.u32 %v192, 7
    %v194 = vsub.s32 1, %v193
    %v195 = vrot.slane %v186, %v194
    %v230 = vunpack.c.l.b16 %v154
    %v231 = vunpack.c.h.b16 %v154
    %v232 = vunpack.c.l.b16 %v155
    %v233 = vunpack.c.h.b16 %v155
    %v234 = vunpack.c.l.b16 %v156
    %v235 = vunpack.c.h.b16 %v156
    %v236 = vunpack.c.l.b16 %v157
    %v237 = vunpack.c.h.b16 %v157
    %v238 = vunpack.c.l.b16 %v158
    %v239 = vunpack.c.h.b16 %v158
    %v240 = vunpack.c.l.b16 %v159
    %v241 = vunpack.c.h.b16 %v159
    %v242 = vunpack.c.l.b16 %v160
    %v243 = vunpack.c.h.b16 %v160
    %v244 = vunpack.c.l.b16 %v161
    %v245 = vunpack.c.h.b16 %v161
    %v246 = vunpack.c.l.b16 %v162
    %v247 = vunpack.c.h.b16 %v162
    %v248 = vunpack.c.l.b16 %v163
    %v249 = vunpack.c.h.b16 %v163
    %v250 = vunpack.c.l.b16 %v164
    %v251 = vunpack.c.h.b16 %v164
    %v252 = vunpack.c.l.b16 %v165
    %v253 = vunpack.c.h.b16 %v165
    %v254 = vunpack.c.l.b16 %v166
    %v255 = vunpack.c.h.b16 %v166
    %v256 = vunpack.c.l.b16 %v167
    %v257 = vunpack.c.h.b16 %v167
    %v258 = vunpack.c.l.b16 %v168
    %v259 = vunpack.c.h.b16 %v168
    %v260 = vunpack.c.l.b16 %v169
    %v261 = vunpack.c.h.b16 %v169
    %v262 = vunpack.c.l.b16 %v170
    %v263 = vunpack.c.h.b16 %v170
    %v264 = vunpack.c.l.b16 %v171
    %v265 = vunpack.c.h.b16 %v171
    %v266 = vunpack.c.l.b16 %v172
    %v267 = vunpack.c.h.b16 %v172
    %v268 = vunpack.c.l.b16 %v173
    %v269 = vunpack.c.h.b16 %v173
    %v270 = vunpack.c.l.b16 %v174
    %v271 = vunpack.c.h.b16 %v174
    %v272 = vunpack.c.l.b16 %v175
    %v273 = vunpack.c.h.b16 %v175
    %v274 = vunpack.c.l.b16 %v176
    %v275 = vunpack.c.h.b16 %v176
    %v276 = vunpack.c.l.b16 %v177
    %v277 = vunpack.c.h.b16 %v177
    %v278 = vunpack.c.l.b16 %v178
    %v279 = vunpack.c.h.b16 %v178
    %v280 = vunpack.c.l.b16 %v179
    %v281 = vunpack.c.h.b16 %v179
    %v282 = vunpack.c.l.b16 %v180
    %v283 = vunpack.c.h.b16 %v180
    %v284 = vunpack.c.l.b16 %v181
    %v285 = vunpack.c.h.b16 %v181
    %v286 = vunpack.c.l.b16 %v182
    %v287 = vunpack.c.h.b16 %v182
    %v288 = vunpack.c.l.b16 %v183
    %v289 = vunpack.c.h.b16 %v183
    %v290 = vunpack.c.l.b16 %v184
    %v291 = vunpack.c.h.b16 %v184
    %v292 = vunpack.c.l.b16 %v185
    %v293 = vunpack.c.h.b16 %v185
    %v294 = vpack.c.b16 %v232, %v230
    %v295 = vpack.c.b16 %v233, %v231
    %v296 = vpack.c.b16 %v236, %v234
    %v297 = vpack.c.b16 %v237, %v235
    %v298 = vpack.c.b16 %v240, %v238
    %v299 = vpack.c.b16 %v241, %v239
    %v300 = vpack.c.b16 %v244, %v242
    %v301 = vpack.c.b16 %v245, %v243
    %v302 = vpack.c.b16 %v248, %v246
    %v303 = vpack.c.b16 %v249, %v247
    %v304 = vpack.c.b16 %v252, %v250
    %v305 = vpack.c.b16 %v253, %v251
    %v306 = vpack.c.b16 %v256, %v254
    %v307 = vpack.c.b16 %v257, %v255
    %v308 = vpack.c.b16 %v260, %v258
    %v309 = vpack.c.b16 %v261, %v259
    %v310 = vpack.c.b16 %v264, %v262
    %v311 = vpack.c.b16 %v265, %v263
    %v312 = vpack.c.b16 %v268, %v266
    %v313 = vpack.c.b16 %v269, %v267
    %v314 = vpack.c.b16 %v272, %v270
    %v315 = vpack.c.b16 %v273, %v271
    %v316 = vpack.c.b16 %v276, %v274
    %v317 = vpack.c.b16 %v277, %v275
    %v318 = vpack.c.b16 %v280, %v278
    %v319 = vpack.c.b16 %v281, %v279
    %v320 = vpack.c.b16 %v284, %v282
    %v321 = vpack.c.b16 %v285, %v283
    %v322 = vpack.c.b16 %v288, %v286
    %v323 = vpack.c.b16 %v289, %v287
    %v324 = vpack.c.b16 %v292, %v290
    %v325 = vpack.c.b16 %v293, %v291
    %358 = vmatprep.subr.bf16.mxu0 %v309
    %359 = vmatpush1.bf16.msra.mxu0 %v308
    %360 = vmatprep.subr.bf16.mxu0 %v307
    %361 = vmatpush1.bf16.msra.mxu0 %v306
    %362 = vmatprep.subr.bf16.mxu0 %v305
    %363 = vmatpush1.bf16.msra.mxu0 %v304
    %364 = vmatprep.subr.bf16.mxu0 %v303
    %365 = vmatpush1.bf16.msra.mxu0 %v302
    %366 = vmatprep.subr.bf16.mxu0 %v301
    %367 = vmatpush1.bf16.msra.mxu0 %v300
    %368 = vmatprep.subr.bf16.mxu0 %v299
    %369 = vmatpush1.bf16.msra.mxu0 %v298
    %370 = vmatprep.subr.bf16.mxu0 %v297
    %371 = vmatpush1.bf16.msra.mxu0 %v296
    %372 = vmatprep.subr.bf16.mxu0 %v295
    %373 = vmatpush1.bf16.msra.mxu0 %v294
    %374 = vmatprep.subr.bf16.mxu0 %v325
    %375 = vmatpush2.bf16.msra.mxu0 %v324
    %376 = vmatprep.subr.bf16.mxu0 %v323
    %377 = vmatpush2.bf16.msra.mxu0 %v322
    %378 = vmatprep.subr.bf16.mxu0 %v321
    %379 = vmatpush2.bf16.msra.mxu0 %v320
    %380 = vmatprep.subr.bf16.mxu0 %v319
    %381 = vmatpush2.bf16.msra.mxu0 %v318
    %382 = vmatprep.subr.bf16.mxu0 %v317
    %383 = vmatpush2.bf16.msra.mxu0 %v316
    %384 = vmatprep.subr.bf16.mxu0 %v315
    %385 = vmatpush2.bf16.msra.mxu0 %v314
    %386 = vmatprep.subr.bf16.mxu0 %v313
    %387 = vmatpush2.bf16.msra.mxu0 %v312
    %388 = vmatprep.subr.bf16.mxu0 %v311
    %389 = vmatpush2.bf16.msra.mxu0 %v310
    %390 = vmatprep.mubr.bf16.mxu0 %v153
    %391 = vmatmul.mubr.bf16.gmra.mxu0 %v152
    %v392 = vpop.f32.mrf.mxu0
    %v393 = vadd.f32 %v191, %v392
    %v394 = vpop.f32.mrf.mxu0
    %v395 = vadd.f32 %v195, %v394
    %v396 = vpop.f32.mrf.mxu0
    %v397 = vpop.f32.mrf.mxu0
    %398 = vdwg.mxu0
    %v399 = vmax.f32 %v393, 0.0
    %v400 = vmax.f32 %v395, 0.0
    %v401 = vld [vmem:[%s5] sm:$0xff]
    %v402 = vld [vmem:[%s5 + $0x8] sm:$0xff]
    %v403 = vpack.c.bf16 %v399, %v399
    %v404 = vpack.c.bf16 %v400, %v400
    %v405 = vld [vmem:[%s6] sm:$0xff]
    %v406 = vld [vmem:[%s6 + $0x8] sm:$0xff]
    %408 = vset.pattern.permute.xlu0 0
    %409 = vperm.xlu0 %408, %v405
    %v410 = vpop.permute.xlu0 %409
    %413 = vset.pattern.permute.xlu0 0
    %414 = vperm.xlu0 %413, %v406
    %v415 = vpop.permute.xlu0 %414
    %v419 = vunpack.c.l.b16 %v401
    %v420 = vunpack.c.h.b16 %v401
    %v421 = vunpack.c.l.b16 %v402
    %v422 = vunpack.c.h.b16 %v402
    %v423 = vpack.c.b16 %v421, %v419
    %v424 = vpack.c.b16 %v422, %v420
    %427 = vmatprep.subr.bf16.mxu0 0
    %428 = vmatpush1.bf16.xpose.msra.mxu0 0
    %429 = vmatprep.subr.bf16.mxu0 0
    %430 = vmatpush1.bf16.xpose.msra.mxu0 0
    %431 = vmatprep.subr.bf16.mxu0 0
    %432 = vmatpush1.bf16.xpose.msra.mxu0 0
    %433 = vmatprep.subr.bf16.mxu0 0
    %434 = vmatpush1.bf16.xpose.msra.mxu0 0
    %435 = vmatprep.subr.bf16.mxu0 0
    %436 = vmatpush1.bf16.xpose.msra.mxu0 0
    %437 = vmatprep.subr.bf16.mxu0 0
    %438 = vmatpush1.bf16.xpose.msra.mxu0 0
    %439 = vmatprep.subr.bf16.mxu0 0
    %440 = vmatpush1.bf16.xpose.msra.mxu0 0
    %441 = vmatprep.subr.bf16.mxu0 %v404
    %442 = vmatpush1.bf16.xpose.msra.mxu0 %v403
    %443 = vmatprep.subr.bf16.mxu0 0
    %444 = vmatpush2.bf16.xpose.msra.mxu0 0
    %445 = vmatprep.subr.bf16.mxu0 0
    %446 = vmatpush2.bf16.xpose.msra.mxu0 0
    %447 = vmatprep.subr.bf16.mxu0 0
    %448 = vmatpush2.bf16.xpose.msra.mxu0 0
    %449 = vmatprep.subr.bf16.mxu0 0
    %450 = vmatpush2.bf16.xpose.msra.mxu0 0
    %451 = vmatprep.subr.bf16.mxu0 0
    %452 = vmatpush2.bf16.xpose.msra.mxu0 0
    %453 = vmatprep.subr.bf16.mxu0 0
    %454 = vmatpush2.bf16.xpose.msra.mxu0 0
    %455 = vmatprep.subr.bf16.mxu0 0
    %456 = vmatpush2.bf16.xpose.msra.mxu0 0
    %457 = vmatprep.subr.bf16.mxu0 0
    %458 = vmatpush2.bf16.xpose.msra.mxu0 0
    %459 = vmatprep.mubr.bf16.mxu0 %v424
    %460 = vmatmul.mubr.bf16.gmra.mxu0 %v423
    %v461 = vpop.f32.mrf.mxu0
    %v462 = vadd.f32 %v410, %v461
    %v463 = vpop.f32.mrf.mxu0
    %v464 = vpop.f32.mrf.mxu0
    %v465 = vadd.f32 %v415, %v464
    %v466 = vpop.f32.mrf.mxu0
    %467 = vdwg.mxu0
    %v468 = vtanh.pop %v462
    %v469 = vtanh.pop %v465
    %vm470 = vcmask 64512
    %471 = vst.msk [vmem:[%s7] sm:$0xff] %vm470, %v468
    %472 = vst.msk [vmem:[%s7 + $0x8] sm:$0xff] %vm470, %v469
    // Predicated region
    $region42: #{tpu_custom_call.1} parent=1 // pred_check
      _
    $region43: #{tpu_custom_call.1} parent=1 // pred_check_branch
      %474 = sbr.rel (0) target = $region45
    $region44: #{tpu_custom_call.1} parent=1 // pred_region
      _
    $region45: #{tpu_custom_call.1} parent=1 // pred_fallthru
      _
    // Predicated region
    $region46: #{tpu_custom_call.1} parent=1 // pred_check
      _
    $region47: #{tpu_custom_call.1} parent=1 // pred_check_branch
      %476 = sbr.rel (0) target = $region49
    $region48: #{tpu_custom_call.1} parent=1 // pred_region
      _
    $region49: #{tpu_custom_call.1} parent=1 // pred_fallthru
      _
    %477 = vsyncpa [#allocation3], 1
    %478 = vsyncpa [#allocation5], 1

</llo_original>
